<compile_context>
chip_gen: v5e
topology: v5e:2x2
jax: 0.10.0
libtpu: 0.0.40
codegen_flags: <defaults>
</compile_context>

<pallas_src>
import functools

import jax
import jax.numpy as jnp
from jax.experimental import pallas as pl
from jax.experimental.pallas import tpu as pltpu

# ASL hyper-parameters (same defaults as the PyTorch module __init__).
GAMMA_NEG = 4  # integer => specialized pow (multiplies only)
GAMMA_POS = 1
CLIP = 0.05
EPS = 1e-8

# Total per-step VMEM footprint target (double-buffered inputs + f32 temps).
# Safe on every generation: v5e/v6e 128 MiB physical, v7x 64 MiB physical.
_VMEM_FOOTPRINT_BUDGET = 28 * 1024 * 1024
_VMEM_SLACK_BYTES = 4 * 1024 * 1024
_MAX_TILE_ROWS = 16384  # sanity cap for tiny-C shapes
_N_F32_TEMPS = 6        # conservative count of live f32 temporaries per row


def _int_pow(v, n: int):
    """v**n for a positive integer n, unrolled at trace time (VPU muls only).

    Matches torch.pow for base >= 0: pow(0, n>0) == 0.
    """
    assert n >= 1
    result = None
    acc = v
    while n:
        if n & 1:
            result = acc if result is None else result * acc
        n >>= 1
        if n:
            acc = acc * acc
    return result


def _asl_kernel(x_ref, y_ref, out_ref, *, tile_b, valid_b, need_mask):
    x = x_ref[...].astype(jnp.float32)
    y = y_ref[...].astype(jnp.float32)
    is_pos = y > 0.5  # binarized multi-label targets

    # sigmoid(x) = 0.5 * tanh(0.5 * x) + 0.5  -> single EUP push per element.
    xs_pos = 0.5 * jnp.tanh(0.5 * x) + 0.5
    xs_neg = jnp.minimum((1.0 - xs_pos) + CLIP, 1.0)  # add_(clip).clamp_(max=1)

    # y*log(clamp(xs_pos,eps)) + (1-y)*log(clamp(xs_neg,eps)) collapses to a
    # single select + single log for binary y.
    p = jnp.where(is_pos, xs_pos, xs_neg)
    loss = jnp.log(jnp.maximum(p, EPS))

    # Asymmetric focusing weight:
    #   base = 1 - xs_pos*y - xs_neg*(1-y) = 1 - p   (>= 0)
    #   w    = base ** (gamma_pos*y + gamma_neg*(1-y))
    # Specialized for the compile-time integer gammas -> pure VPU multiplies.
    base = 1.0 - p
    w = jnp.where(is_pos, _int_pow(base, GAMMA_POS), _int_pow(base, GAMMA_NEG))
    loss = loss * w

    def _store(contrib):
        # Sublane-only partial reduce; lane-dense (1, 1, C) store.  The final
        # cross-lane sum + negation happen in the wrapper (keeps the grid
        # axis "parallel").
        psum = jnp.sum(contrib, axis=0, keepdims=True)  # (1, C)
        out_ref[...] = psum.reshape((1, 1) + psum.shape[1:])

    if need_mask:
        # Last block is partial (no HBM padding): zero the garbage rows.  The
        # mask cost is only paid on the last grid step via pl.when.
        i = pl.program_id(0)
        last = pl.num_programs(0) - 1

        @pl.when(i == last)
        def _():
            row = jax.lax.broadcasted_iota(jnp.int32, loss.shape, 0) + i * tile_b
            _store(jnp.where(row < valid_b, loss, 0.0))

        @pl.when(i != last)
        def _():
            _store(loss)
    else:
        _store(loss)


def asl_loss_pallas(x, y, *, tile_b=None):
    """x: [B, C] logits, y: [B, C] binarized targets -> scalar ASL loss."""
    B, C = x.shape
    assert y.shape == (B, C), (x.shape, y.shape)

    xi = x.dtype.itemsize
    yi = y.dtype.itemsize
    # Sublane tiling requirement from the narrowest input dtype
    # (f32 -> 8, bf16 -> 16, int8/bool -> 32).
    sub = max(32 // xi, 32 // yi)

    bytes_per_row_in = C * (xi + yi)
    # Per-row VMEM footprint: double-buffered inputs + live f32 temporaries.
    footprint_per_row = 2 * bytes_per_row_in + _N_F32_TEMPS * C * 4

    if tile_b is None:
        tile_b = _VMEM_FOOTPRINT_BUDGET // footprint_per_row
        tile_b = max(sub, min(_MAX_TILE_ROWS, tile_b))
    # Align down to the sublane tile.
    tile_b = max(sub, (tile_b // sub) * sub)
    # Keep >= 2 grid steps whenever the batch allows it (so both v7x
    # TensorCores get work on the "parallel" batch axis); this also caps
    # tile_b at the rounded-up batch size.
    half_b = -(-B // 2)                      # ceil(B / 2)
    half_b = -(-half_b // sub) * sub         # round up to sublane tile
    tile_b = min(tile_b, half_b)

    num_tiles = pl.cdiv(B, tile_b)
    need_mask = (B % tile_b) != 0  # last block is partial; mask in-kernel

    kernel = functools.partial(
        _asl_kernel, tile_b=tile_b, valid_b=B, need_mask=need_mask
    )

    # Explicit scoped-VMEM limit derived from the same footprint model
    # (v5e default is only 16 MiB; v7x physical is 64 MiB -> cap at 40 MiB).
    vmem_limit = tile_b * footprint_per_row + 2 * C * 4 + _VMEM_SLACK_BYTES
    vmem_limit = max(16 * 1024 * 1024, min(vmem_limit, 40 * 1024 * 1024))

    cost = pl.CostEstimate(
        flops=16 * B * C,                    # VPU elementwise work
        transcendentals=2 * B * C,           # tanh + log per element
        bytes_accessed=B * C * (xi + yi) + num_tiles * C * 4,
    )

    partials = pl.pallas_call(
        kernel,
        out_shape=jax.ShapeDtypeStruct((num_tiles, 1, C), jnp.float32),
        grid_spec=pltpu.PrefetchScalarGridSpec(
            num_scalar_prefetch=0,
            grid=(num_tiles,),
            in_specs=[
                pl.BlockSpec((tile_b, C), lambda i: (i, 0)),
                pl.BlockSpec((tile_b, C), lambda i: (i, 0)),
            ],
            out_specs=pl.BlockSpec((1, 1, C), lambda i: (i, 0, 0)),
        ),
        compiler_params=pltpu.CompilerParams(
            # No carried accumulator -> batch axis is truly parallel
            # (lets v7x shard the grid across both TensorCores).
            dimension_semantics=("parallel",),
            vmem_limit_bytes=vmem_limit,
        ),
        cost_estimate=cost,
    )(x, y)

    # Tiny final reduction + negation outside the kernel.
    return -jnp.sum(partials)


def asl_loss_ref(x, y):
    """Pure-JAX reference mirroring the PyTorch forward exactly."""
    x = x.astype(jnp.float32)
    y = y.astype(jnp.float32)
    anti_y = 1.0 - y
    xs_pos = jax.nn.sigmoid(x)
    xs_neg = jnp.minimum(1.0 - xs_pos + CLIP, 1.0)
    loss = y * jnp.log(jnp.maximum(xs_pos, EPS))
    loss = loss + anti_y * jnp.log(jnp.maximum(xs_neg, EPS))
    base = 1.0 - xs_pos * y - xs_neg * anti_y
    expo = GAMMA_POS * y + GAMMA_NEG * anti_y
    loss = loss * jnp.power(base, expo)
    return -jnp.sum(loss)


if __name__ == "__main__":
    key = jax.random.PRNGKey(0)
    kx, ky, kx2, ky2, kx3, ky3 = jax.random.split(key, 6)

    # Multi-label head: batch=16, num_classes=128.
    # y in bf16 (binary values are exact) halves its HBM traffic.
    B, C = 16, 128
    x = jax.random.normal(kx, (B, C), dtype=jnp.float32)
    y = (jax.random.uniform(ky, (B, C)) < 0.3).astype(jnp.bfloat16)
    out = asl_loss_pallas(x, y)
    jax.block_until_ready(out)
    ref = asl_loss_ref(x, y)
    assert jnp.allclose(out, ref, rtol=1e-4, atol=1e-2), (out, ref)

    # Ragged batch exercising the partial-last-block (no jnp.pad) masked path.
    B2, C2 = 13, 256
    x2 = jax.random.normal(kx2, (B2, C2), dtype=jnp.float32)
    y2 = (jax.random.uniform(ky2, (B2, C2)) < 0.3).astype(jnp.float32)
    out2 = asl_loss_pallas(x2, y2)
    jax.block_until_ready(out2)
    ref2 = asl_loss_ref(x2, y2)
    assert jnp.allclose(out2, ref2, rtol=1e-4, atol=1e-2), (out2, ref2)

    # int8 targets (1 byte/elem of HBM traffic for y; 32-row sublane tiles).
    B3, C3 = 64, 128
    x3 = jax.random.normal(kx3, (B3, C3), dtype=jnp.float32)
    y3 = (jax.random.uniform(ky3, (B3, C3)) < 0.3).astype(jnp.int8)
    out3 = asl_loss_pallas(x3, y3)
    jax.block_until_ready(out3)
    ref3 = asl_loss_ref(x3, y3)
    assert jnp.allclose(out3, ref3, rtol=1e-4, atol=1e-2), (out3, ref3)

    print("KERNEL_OK")
</pallas_src>

<mosaic_0001>
module attributes {stable_mosaic.version = 11 : i64} {
  func.func @_asl_kernel(%arg0: i32, %arg1: memref<16x128xf32, #tpu.memory_space<vmem>>, %arg2: memref<16x128xbf16, #tpu.memory_space<vmem>>, %arg3: memref<1x1x128xf32, #tpu.memory_space<vmem>>) attributes {dimension_semantics = [#tpu.dimension_semantics<parallel>], iteration_bounds = array<i64: 1>, scalar_prefetch = 0 : i64, scratch_operands = 0 : i64, tpu.core_type = #tpu.core_type<tc>, window_params = [{transform_indices = @transform_0, window_bounds = array<i64: 16, 128>}, {transform_indices = @transform_1, window_bounds = array<i64: 16, 128>}, {transform_indices = @transform_2, window_bounds = array<i64: 1, 1, 128>}]} {
    %c0 = arith.constant 0 : index
    %c0_0 = arith.constant 0 : index
    %0 = vector.load %arg1[%c0, %c0_0] : memref<16x128xf32, #tpu.memory_space<vmem>>, vector<16x128xf32>
    %c0_1 = arith.constant 0 : index
    %c0_2 = arith.constant 0 : index
    %1 = vector.load %arg2[%c0_1, %c0_2] : memref<16x128xbf16, #tpu.memory_space<vmem>>, vector<16x128xbf16>
    %2 = arith.extf %1 : vector<16x128xbf16> to vector<16x128xf32>
    %cst = arith.constant 5.000000e-01 : f32
    %3 = vector.broadcast %cst : f32 to vector<16x128xf32>
    %4 = arith.cmpf ogt, %2, %3 : vector<16x128xf32>
    %cst_3 = arith.constant 5.000000e-01 : f32
    %5 = vector.broadcast %cst_3 : f32 to vector<16x128xf32>
    %6 = arith.mulf %5, %0 : vector<16x128xf32>
    %7 = math.tanh %6 : vector<16x128xf32>
    %cst_4 = arith.constant 5.000000e-01 : f32
    %8 = vector.broadcast %cst_4 : f32 to vector<16x128xf32>
    %9 = arith.mulf %8, %7 : vector<16x128xf32>
    %cst_5 = arith.constant 5.000000e-01 : f32
    %10 = vector.broadcast %cst_5 : f32 to vector<16x128xf32>
    %11 = arith.addf %9, %10 : vector<16x128xf32>
    %cst_6 = arith.constant 1.000000e+00 : f32
    %12 = vector.broadcast %cst_6 : f32 to vector<16x128xf32>
    %13 = arith.subf %12, %11 : vector<16x128xf32>
    %cst_7 = arith.constant 5.000000e-02 : f32
    %14 = vector.broadcast %cst_7 : f32 to vector<16x128xf32>
    %15 = arith.addf %13, %14 : vector<16x128xf32>
    %cst_8 = arith.constant 1.000000e+00 : f32
    %16 = vector.broadcast %cst_8 : f32 to vector<16x128xf32>
    %17 = arith.minimumf %15, %16 : vector<16x128xf32>
    %18 = arith.select %4, %11, %17 : vector<16x128xi1>, vector<16x128xf32>
    %cst_9 = arith.constant 9.99999993E-9 : f32
    %19 = vector.broadcast %cst_9 : f32 to vector<16x128xf32>
    %20 = arith.maximumf %18, %19 : vector<16x128xf32>
    %21 = math.log %20 : vector<16x128xf32>
    %cst_10 = arith.constant 1.000000e+00 : f32
    %22 = vector.broadcast %cst_10 : f32 to vector<16x128xf32>
    %23 = arith.subf %22, %18 : vector<16x128xf32>
    %24 = arith.mulf %23, %23 : vector<16x128xf32>
    %25 = arith.mulf %24, %24 : vector<16x128xf32>
    %26 = arith.select %4, %23, %25 : vector<16x128xi1>, vector<16x128xf32>
    %27 = arith.mulf %21, %26 : vector<16x128xf32>
    %cst_11 = arith.constant dense<0.000000e+00> : vector<128xf32>
    %28 = vector.multi_reduction <add>, %27, %cst_11 [0] : vector<16x128xf32> to vector<128xf32>
    %29 = vector.shape_cast %28 : vector<128xf32> to vector<1x128xf32>
    %30 = vector.shape_cast %29 : vector<1x128xf32> to vector<1x1x128xf32>
    %c0_12 = arith.constant 0 : index
    %c0_13 = arith.constant 0 : index
    %c0_14 = arith.constant 0 : index
    %31 = vector.load %arg3[%c0_12, %c0_13, %c0_14] : memref<1x1x128xf32, #tpu.memory_space<vmem>>, vector<1x1x128xf32>
    tpu.vector_store %arg3[%c0_12, %c0_13, %c0_14], %30 {strides = array<i32>} : memref<1x1x128xf32, #tpu.memory_space<vmem>>, vector<1x1x128xf32>,
    return
  }
  func.func @transform_0(%arg0: i32) -> (i32, i32) {
    %c0_i32 = arith.constant 0 : i32
    %c0_i32_0 = arith.constant 0 : i32
    return %arg0, %c0_i32 : i32, i32
  }
  func.func @transform_1(%arg0: i32) -> (i32, i32) {
    %c0_i32 = arith.constant 0 : i32
    %c0_i32_0 = arith.constant 0 : i32
    return %arg0, %c0_i32 : i32, i32
  }
  func.func @transform_2(%arg0: i32) -> (i32, i32, i32) {
    %c0_i32 = arith.constant 0 : i32
    %c0_i32_0 = arith.constant 0 : i32
    %c0_i32_1 = arith.constant 0 : i32
    return %arg0, %c0_i32, %c0_i32_0 : i32, i32, i32
  }
}

</mosaic_0001>

<llo_original>
// kernel: tpu_custom_call.1
$region0: #{tpu_custom_call.1}
  #allocation0 [shape = 'u32[]', space=smem, size = 0x4, offset = 0x4, fixed_abs, tag = 'smem constant byte address 0x4 - core index']
  #allocation1 [shape = 'u32[72,128]{1,0:T(1,128)}', space=vmem, size = 0x9000, scoped, tag = 'internal scratch']
  %s0 = inlined_call_operand.hbm [shape: f32[16,128], index: 0, kind: input, shape index: {}]
  %s1 = inlined_call_operand.hbm [shape: bf16[16,128], index: 1, kind: input, shape index: {}]
  %s2 = inlined_call_operand.hbm [shape: f32[1,1,128], index: 2, kind: output, shape index: {}]
  %s3 = sld [smem:[#allocation0]]
  $region26: #{tpu_custom_call.1} parent=0
    _
  %s5 = ssub.s32 1, %s3
  %s6 = scalar_select 0, %s5, %s3
  $region1: #{tpu_custom_call.1} parent=0
    #allocation2 [shape = 'u8[8192]{0}', space=vmem, size = 0x2000, scoped, tag = 'input window, operand 0, single buffered']
    #allocation3 [shape = 's32[1]{0}', space=sflag, size = 0x4, scoped, tag = 'scoped memory for tpu_custom_call.1']
    #allocation4 [shape = 's32[1]{0}', space=sflag, size = 0x4, scoped, tag = 'scoped memory for tpu_custom_call.1']
    #allocation5 [shape = 'u8[4096]{0}', space=vmem, size = 0x1000, scoped, tag = 'input window, operand 1, single buffered']
    #allocation6 [shape = 's32[1]{0}', space=sflag, size = 0x4, scoped, tag = 'scoped memory for tpu_custom_call.1']
    #allocation7 [shape = 'u8[512]{0}', space=vmem, size = 0x400, scoped, tag = 'output window, operand 0, single buffered']
    %7 = vsyncpa [#allocation3], 0
    %8 = vsyncpa [#allocation6], 0
    %9 = vsyncpa [#allocation4], 0
    // Predicated region
    $region2: #{tpu_custom_call.1} parent=1 // pred_check
      _
    $region3: #{tpu_custom_call.1} parent=1 // pred_check_branch
      %11 = sbr.rel (0) target = $region5
    $region4: #{tpu_custom_call.1} parent=1 // pred_region
      %13 = vsyncadd [#allocation3], 0
      %s14 = sshll.u32 %s0, 4
      %s15 = int_to_ptr.hbm [resolvable:$true] %s14
      %s16 = sshll.u32 [#allocation2], 4
      %s17 = int_to_ptr.vmem [resolvable:$true] %s16
      %22 = dma.hbm_to_vmem [thread:$0]  %s15, 256, %s17, [#allocation3], 128, 128, 8
    $region5: #{tpu_custom_call.1} parent=1 // pred_fallthru
      _
    // Predicated region
    $region6: #{tpu_custom_call.1} parent=1 // pred_check
      _
    $region7: #{tpu_custom_call.1} parent=1 // pred_check_branch
      %24 = sbr.rel (0) target = $region9
    $region8: #{tpu_custom_call.1} parent=1 // pred_region
      %26 = vsyncadd [#allocation6], 0
      %s27 = sshll.u32 %s1, 4
      %s28 = int_to_ptr.hbm [resolvable:$true] %s27
      %s29 = sshll.u32 [#allocation5], 4
      %s30 = int_to_ptr.vmem [resolvable:$true] %s29
      %35 = dma.hbm_to_vmem [thread:$0]  %s28, 128, %s30, [#allocation6], 64, 64, 4
    $region9: #{tpu_custom_call.1} parent=1 // pred_fallthru
      _
    // Predicated region
    $region10: #{tpu_custom_call.1} parent=1 // pred_check
      _
    $region11: #{tpu_custom_call.1} parent=1 // pred_check_branch
      %37 = sbr.rel (0) target = $region13
    $region12: #{tpu_custom_call.1} parent=1 // pred_region
      %39 = dma.done [#allocation3], 256
    $region13: #{tpu_custom_call.1} parent=1 // pred_fallthru
      _
    // Predicated region
    $region14: #{tpu_custom_call.1} parent=1 // pred_check
      _
    $region15: #{tpu_custom_call.1} parent=1 // pred_check_branch
      %41 = sbr.rel (0) target = $region17
    $region16: #{tpu_custom_call.1} parent=1 // pred_region
      %43 = dma.done [#allocation6], 128
    $region17: #{tpu_custom_call.1} parent=1 // pred_fallthru
      _
    %v44 = vld [vmem:[#allocation2] sm:$0xff]
    %v45 = vld [vmem:[#allocation2 + $0x8] sm:$0xff]
    %v46 = vld [vmem:[#allocation5] sm:$0xf]
    %v47 = vld [vmem:[#allocation5 + $0x4] sm:$0xf]
    %v48 = vunpack.c.l.bf16 %v46
    %v49 = vunpack.c.l.bf16 %v47
    %vm50 = vcmp.gt.f32.partialorder %v48, 0.5
    %vm51 = vcmp.gt.f32.partialorder %v49, 0.5
    %v52 = vmul.f32 %v44, 0.5
    %v53 = vmul.f32 %v45, 0.5
    %v54 = vtanh.pop %v52
    %v55 = vtanh.pop %v53
    %v56 = vmul.f32 %v54, 0.5
    %v57 = vmul.f32 %v55, 0.5
    %v58 = vadd.f32 %v56, 0.5
    %v59 = vadd.f32 %v57, 0.5
    %v60 = vsub.f32 1.0, %v58
    %v61 = vsub.f32 1.0, %v59
    %v62 = vadd.f32 %v60, 0.05
    %v63 = vadd.f32 %v61, 0.05
    %v64 = vmin.f32 %v62, 1.0
    %v65 = vmin.f32 %v63, 1.0
    %v66 = vsel %vm50, %v58, %v64
    %v67 = vsel %vm51, %v59, %v65
    %v68 = vmax.f32 %v66, 1e-08
    %v69 = vmax.f32 %v67, 1e-08
    %v70 = vlog2.pop %v68
    %v71 = vmul.f32 %v70, 0.6931472
    %v72 = vlog2.pop %v69
    %v73 = vmul.f32 %v72, 0.6931472
    %v74 = vsub.f32 1.0, %v66
    %v75 = vsub.f32 1.0, %v67
    %v76 = vmul.f32 %v74, %v74
    %v77 = vmul.f32 %v75, %v75
    %v78 = vmul.f32 %v76, %v76
    %v79 = vmul.f32 %v77, %v77
    %v80 = vsel %vm50, %v74, %v78
    %v81 = vsel %vm51, %v75, %v79
    %v82 = vmul.f32 %v71, %v80
    %v83 = vmul.f32 %v73, %v81
    %v84 = vadd.f32 %v82, %v83
    %v85 = vrot.slane %v84, 4
    %v86 = vadd.f32 %v84, %v85
    %v87 = vrot.slane %v86, 2
    %v88 = vadd.f32 %v86, %v87
    %v89 = vrot.slane %v88, 1
    %v90 = vadd.f32 %v88, %v89
    %91 = vst [vmem:[#allocation7] sm:$0x1] %v90
    // Predicated region
    $region18: #{tpu_custom_call.1} parent=1 // pred_check
      _
    $region19: #{tpu_custom_call.1} parent=1 // pred_check_branch
      %93 = sbr.rel (0) target = $region21
    $region20: #{tpu_custom_call.1} parent=1 // pred_region
      %95 = vsyncadd [#allocation4], 0
      %s97 = sshll.u32 [#allocation7], 4
      %s98 = int_to_ptr.vmem [resolvable:$true] %s97
      %s99 = sshll.u32 %s2, 4
      %s100 = int_to_ptr.hbm [resolvable:$true] %s99
      %102 = dma.vmem_to_hbm [thread:$0]  %s98, 16, %s100, [#allocation4]
    $region21: #{tpu_custom_call.1} parent=1 // pred_fallthru
      _
    // Predicated region
    $region22: #{tpu_custom_call.1} parent=1 // pred_check
      _
    $region23: #{tpu_custom_call.1} parent=1 // pred_check_branch
      %104 = sbr.rel (0) target = $region25
    $region24: #{tpu_custom_call.1} parent=1 // pred_region
      %106 = dma.done [#allocation4], 16
    $region25: #{tpu_custom_call.1} parent=1 // pred_fallthru
      _
    %107 = vsyncpa [#allocation3], 1
    %108 = vsyncpa [#allocation6], 1
    %109 = vsyncpa [#allocation4], 1

</llo_original>
